<compile_context>
chip_gen: v7x
topology: tpu7x:2x2x1
jax: 0.10.0
libtpu: 0.0.40
codegen_flags: <defaults>
</compile_context>

<pallas_src>
import functools

import jax
import jax.numpy as jnp
from jax.experimental import pallas as pl
from jax.experimental.pallas import tpu as pltpu


# ----------------------------------------------------------------------------
# Pallas kernel
# ----------------------------------------------------------------------------
def _l2norm_kernel(x_ref, w_ref, o_ref, *, eps):
    """Per-pixel L2 normalization over channels, scaled by a per-channel weight.

    x_ref: (1, C, T)  block of the NCHW input viewed as (N, C, H*W)
    w_ref: (C, 1)     full per-channel weight (f32)
    o_ref: (1, C, T)  output block (same dtype as the input)
    """
    x = x_ref[0].astype(jnp.float32)                   # (C, T) upcast in-register
    ssq = jnp.sum(x * x, axis=0, keepdims=True)        # (1, T) sublane channel reduce
    inv = 1.0 / (jnp.sqrt(ssq) + eps)                  # exact PyTorch eps placement
    # Keep the scale path fused in one statement: (C,1)*(1,T) -> (C,T), then * x.
    o_ref[0] = (x * (w_ref[...] * inv)).astype(o_ref.dtype)


# ----------------------------------------------------------------------------
# Wrapper
# ----------------------------------------------------------------------------
def ssd_l2norm(x, weight, eps=1e-10):
    """SSDL2Norm.forward.  x: (N, C, H, W); weight: (C,).  Returns NCHW, same dtype."""
    N, C, H, W = x.shape
    HW = H * W
    x3 = x.reshape(N, C, HW)                           # contiguous merge: free

    itemsize = jnp.dtype(x.dtype).itemsize
    # Lane-tile T: largest multiple of 128 such that one (C, T) block stays <= ~2 MiB
    # (so 2x double-buffered in+out blocks fit v5e's default scoped VMEM with headroom),
    # and never larger than the (128-rounded) spatial extent.
    budget = 2 * 1024 * 1024
    max_t = max(128, (budget // max(1, C * itemsize)) // 128 * 128)
    T = min(max_t, ((HW + 127) // 128) * 128)
    num_t = (HW + T - 1) // T                          # cdiv: last block may be partial
    grid = (N, num_t)

    w2 = weight.reshape(C, 1).astype(jnp.float32)      # tiny; keep weights in f32

    out = pl.pallas_call(
        functools.partial(_l2norm_kernel, eps=float(eps)),
        out_shape=jax.ShapeDtypeStruct((N, C, HW), x.dtype),
        grid_spec=pltpu.PrefetchScalarGridSpec(
            num_scalar_prefetch=0,
            grid=grid,
            in_specs=[
                pl.BlockSpec((1, C, T), lambda n, t: (n, 0, t)),
                pl.BlockSpec((C, 1), lambda n, t: (0, 0)),
            ],
            out_specs=pl.BlockSpec((1, C, T), lambda n, t: (n, 0, t)),
        ),
        compiler_params=pltpu.CompilerParams(
            dimension_semantics=("parallel", "parallel")),
        cost_estimate=pl.CostEstimate(
            flops=4 * N * C * HW,
            transcendentals=2 * N * HW,
            bytes_accessed=2 * N * C * HW * itemsize + C * 4),
    )(x3, w2)

    return out.reshape(N, C, H, W)


# Pure-JAX reference implementing the exact PyTorch formula (for validation).
def ssd_l2norm_ref(x, weight, eps=1e-10):
    xf = x.astype(jnp.float32)
    norm = jnp.sqrt(jnp.sum(xf * xf, axis=1, keepdims=True)) + eps
    return (xf / norm) * weight.reshape(1, -1, 1, 1).astype(jnp.float32)


# ----------------------------------------------------------------------------
# Driver
# ----------------------------------------------------------------------------
if __name__ == "__main__":
    key = jax.random.PRNGKey(0)
    k1, k2, k3 = jax.random.split(key, 3)

    # Default SSDL2Norm config: 512 channels, weight initialized to scale=20 (NCHW).
    x = jax.random.normal(k1, (2, 512, 16, 16), jnp.float32)
    weight = jnp.full((512,), 20.0, jnp.float32)
    out = jax.jit(ssd_l2norm)(x, weight)
    jax.block_until_ready(out)
    ref = ssd_l2norm_ref(x, weight)
    assert out.shape == x.shape and out.dtype == x.dtype
    assert jnp.allclose(out, ref, rtol=1e-4, atol=1e-5), \
        float(jnp.max(jnp.abs(out - ref)))

    # Non-128-aligned spatial extent (10x10=100) exercises the partial-edge-block path.
    x2 = jax.random.normal(k2, (2, 64, 10, 10), jnp.float32)
    w2 = jnp.full((64,), 20.0, jnp.float32)
    out2 = jax.jit(ssd_l2norm)(x2, w2)
    jax.block_until_ready(out2)
    ref2 = ssd_l2norm_ref(x2, w2)
    assert jnp.allclose(out2, ref2, rtol=1e-4, atol=1e-5), \
        float(jnp.max(jnp.abs(out2 - ref2)))

    # bf16 activations: no wrapper upcast copy, f32 math inside, bf16 out.
    x3 = jax.random.normal(k3, (2, 64, 10, 10), jnp.float32).astype(jnp.bfloat16)
    out3 = jax.jit(ssd_l2norm)(x3, w2)
    jax.block_until_ready(out3)
    ref3 = ssd_l2norm_ref(x3, w2)
    assert out3.dtype == jnp.bfloat16
    assert jnp.allclose(out3.astype(jnp.float32), ref3, rtol=3e-2, atol=3e-2), \
        float(jnp.max(jnp.abs(out3.astype(jnp.float32) - ref3)))

    print("KERNEL_OK")
</pallas_src>

<mosaic_0001>
module attributes {stable_mosaic.version = 11 : i64} {
  func.func @_l2norm_kernel(%arg0: i32, %arg1: i32, %arg2: memref<1x512x256xf32, #tpu.memory_space<vmem>>, %arg3: memref<512x1xf32, #tpu.memory_space<vmem>>, %arg4: memref<1x512x256xf32, #tpu.memory_space<vmem>>) attributes {dimension_semantics = [#tpu.dimension_semantics<parallel>, #tpu.dimension_semantics<parallel>], iteration_bounds = array<i64: 2, 1>, scalar_prefetch = 0 : i64, scratch_operands = 0 : i64, tpu.core_type = #tpu.core_type<tc>, window_params = [{transform_indices = @transform_0, window_bounds = array<i64: 1, 512, 256>}, {pipeline_mode = #tpu.pipeline_mode<synchronous>, transform_indices = @transform_1, window_bounds = array<i64: 512, 1>}, {transform_indices = @transform_2, window_bounds = array<i64: 1, 512, 256>}]} {
    %c0 = arith.constant 0 : index
    %c0_0 = arith.constant 0 : index
    %c0_1 = arith.constant 0 : index
    %0 = vector.load %arg2[%c0, %c0_0, %c0_1] : memref<1x512x256xf32, #tpu.memory_space<vmem>>, vector<1x512x256xf32>
    %1 = vector.shape_cast %0 : vector<1x512x256xf32> to vector<512x256xf32>
    %2 = arith.mulf %1, %1 : vector<512x256xf32>
    %cst = arith.constant dense<0.000000e+00> : vector<256xf32>
    %3 = vector.multi_reduction <add>, %2, %cst [0] : vector<512x256xf32> to vector<256xf32>
    %4 = vector.shape_cast %3 : vector<256xf32> to vector<1x256xf32>
    %5 = math.sqrt %4 : vector<1x256xf32>
    %cst_2 = arith.constant 1.000000e-10 : f32
    %6 = vector.broadcast %cst_2 : f32 to vector<1x256xf32>
    %7 = arith.addf %5, %6 : vector<1x256xf32>
    %cst_3 = arith.constant 1.000000e+00 : f32
    %8 = vector.broadcast %cst_3 : f32 to vector<1x256xf32>
    %9 = arith.divf %8, %7 : vector<1x256xf32>
    %c0_4 = arith.constant 0 : index
    %c0_5 = arith.constant 0 : index
    %10 = vector.load %arg3[%c0_4, %c0_5] : memref<512x1xf32, #tpu.memory_space<vmem>>, vector<512x1xf32>
    %11 = vector.broadcast %10 : vector<512x1xf32> to vector<512x256xf32>
    %12 = vector.broadcast %9 : vector<1x256xf32> to vector<512x256xf32>
    %13 = arith.mulf %11, %12 : vector<512x256xf32>
    %14 = arith.mulf %1, %13 : vector<512x256xf32>
    %c0_6 = arith.constant 0 : index
    %c0_7 = arith.constant 0 : index
    %c0_8 = arith.constant 0 : index
    %15 = vector.load %arg4[%c0_6, %c0_7, %c0_8] : memref<1x512x256xf32, #tpu.memory_space<vmem>>, vector<1x512x256xf32>
    %16 = vector.shape_cast %15 : vector<1x512x256xf32> to vector<512x256xf32>
    %17 = vector.shape_cast %14 : vector<512x256xf32> to vector<1x512x256xf32>
    tpu.vector_store %arg4[%c0_6, %c0_7, %c0_8], %17 {strides = array<i32>} : memref<1x512x256xf32, #tpu.memory_space<vmem>>, vector<1x512x256xf32>,
    return
  }
  func.func @transform_0(%arg0: i32, %arg1: i32) -> (i32, i32, i32) {
    %c0_i32 = arith.constant 0 : i32
    %c0_i32_0 = arith.constant 0 : i32
    return %arg0, %c0_i32, %arg1 : i32, i32, i32
  }
  func.func @transform_1(%arg0: i32, %arg1: i32) -> (i32, i32) {
    %c0_i32 = arith.constant 0 : i32
    %c0_i32_0 = arith.constant 0 : i32
    %c0_i32_1 = arith.constant 0 : i32
    return %c0_i32, %c0_i32_0 : i32, i32
  }
  func.func @transform_2(%arg0: i32, %arg1: i32) -> (i32, i32, i32) {
    %c0_i32 = arith.constant 0 : i32
    %c0_i32_0 = arith.constant 0 : i32
    return %arg0, %c0_i32, %arg1 : i32, i32, i32
  }
}

</mosaic_0001>

<llo_original>
// kernel: ssd_l2norm.1
$region0: #{ssd_l2norm.1}
  #allocation0 [shape = 'u32[]', space=smem, size = 0x4, offset = 0x4, fixed_abs, tag = 'smem constant byte address 0x4 - core index']
  #allocation1 [shape = 'u32[144,128]{1,0:T(1,128)}', space=vmem, size = 0x12000, scoped, tag = 'internal scratch']
  %s0 = inlined_call_operand.vmem [shape: f32[2,512,256], index: 0, kind: input, shape index: {}]
  %s1 = inlined_call_operand.vmem [shape: f32[512,1], index: 1, kind: input, shape index: {}]
  %s2 = inlined_call_operand.vmem [shape: f32[2,512,256], index: 2, kind: output, shape index: {}]
  %s3 = sld [smem:[#allocation0]]
  $region41: #{ssd_l2norm.1} parent=0
    _
  %s5 = ssub.s32 1, %s3
  %s6 = scalar_select 0, %s5, %s3
  loop: start=0, step=1, limit=4
  $region2: #{ssd_l2norm.1} parent=0 // loop_pre_header
    _
  $region3: #{ssd_l2norm.1} parent=0 // loop_header
    %s8 = sphi 0, %s12
    %p9 = scmp.ge.s32.totalorder %s8, 4
    %s15 = sphi 0, %s27
    %s16 = sphi 0, %s23
    %s17 = sphi 0, %s15
    %s18 = sphi 0, %s16
    %s19 = sphi 0, %s17
    %s20 = sphi 0, %s18
    %s32 = sphi 0, %s34
    %s35 = sphi 0, %s32
    %s36 = sphi 0, %s35
    %s52 = sphi 0, %s36
    %s56 = sphi 0, %s56
    %s58 = sphi 0, %s56
    %s59 = sphi 0, %s58
    %s73 = sphi 0, %s59
    %s81 = sphi 0, %s83
    %s84 = sphi 0, %s81
    %s85 = sphi 0, %s84
    %s101 = sphi 0, %s85
  $region4: #{ssd_l2norm.1} parent=0 // loop_header_branch
    %11 = sbr.rel (%p9) target = $region8
  $region5: #{ssd_l2norm.1} parent=0 // loop_body
    %s13 = ssub.s32 %s8, 1
    %s14 = ssub.s32 %s8, 2
    %s21 = sadd.s32 1, %s16
    %p22 = scmp.ge.s32.totalorder %s21, 1
    %s23 = scalar_select %p22, 0, %s21
    %s24 = sadd.s32 1, %s15
    %s25 = scalar_select %p22, %s24, %s15
    %p26 = scmp.ge.s32.totalorder %s25, 2
    %s27 = scalar_select %p26, 0, %s25
    %s28 = ssub.s32 %s15, %s27
    %s29 = ssub.s32 %s16, %s23
    %s30 = sor.u32 %s28, %s29
    %p31 = scmp.eq.s32.totalorder %s30, 0
    %s33 = sadd.s32 %s32, 1
    %s34 = scalar_select %p31, %s32, %s33
    %p37 = pneg %p31
    %p38 = scmp.eq.s32.totalorder %s8, 1
    %p39 = por %p37, %p38
    %p40 = scmp.ne.s32.totalorder %s32, %s35
    %p41 = scmp.eq.s32.totalorder %s8, 0
    %p42 = por %p40, %p41
    %p43 = scmp.ne.s32.totalorder %s32, %s35
    %p44 = scmp.eq.s32.totalorder %s13, 1
    %p45 = por %p43, %p44
    %p46 = scmp.ne.s32.totalorder %s35, %s36
    %p47 = scmp.eq.s32.totalorder %s13, 0
    %p48 = por %p46, %p47
    %p49 = scmp.ne.s32.totalorder %s35, %s36
    %p50 = scmp.eq.s32.totalorder %s14, 1
    %p51 = por %p49, %p50
    %p53 = scmp.ne.s32.totalorder %s36, %s52
    %p54 = scmp.eq.s32.totalorder %s14, 0
    %p55 = por %p53, %p54
    %s57 = sadd.s32 %s56, 1
    %p60 = scmp.eq.s32.totalorder %s8, 1
    %p61 = scmp.ne.s32.totalorder %s56, %s58
    %p62 = scmp.eq.s32.totalorder %s8, 0
    %p63 = por %p61, %p62
    %p64 = scmp.ne.s32.totalorder %s56, %s58
    %p65 = scmp.eq.s32.totalorder %s13, 1
    %p66 = por %p64, %p65
    %p67 = scmp.ne.s32.totalorder %s58, %s59
    %p68 = scmp.eq.s32.totalorder %s13, 0
    %p69 = por %p67, %p68
    %p70 = scmp.ne.s32.totalorder %s58, %s59
    %p71 = scmp.eq.s32.totalorder %s14, 1
    %p72 = por %p70, %p71
    %p74 = scmp.ne.s32.totalorder %s59, %s73
    %p75 = scmp.eq.s32.totalorder %s14, 0
    %p76 = por %p74, %p75
    %s77 = ssub.s32 %s15, %s27
    %s78 = ssub.s32 %s16, %s23
    %s79 = sor.u32 %s77, %s78
    %p80 = scmp.eq.s32.totalorder %s79, 0
    %s82 = sadd.s32 %s81, 1
    %s83 = scalar_select %p80, %s81, %s82
    %p86 = pneg %p80
    %p87 = scmp.eq.s32.totalorder %s8, 1
    %p88 = por %p86, %p87
    %p89 = scmp.ne.s32.totalorder %s81, %s84
    %p90 = scmp.eq.s32.totalorder %s8, 0
    %p91 = por %p89, %p90
    %p92 = scmp.ne.s32.totalorder %s81, %s84
    %p93 = scmp.eq.s32.totalorder %s13, 1
    %p94 = por %p92, %p93
    %p95 = scmp.ne.s32.totalorder %s84, %s85
    %p96 = scmp.eq.s32.totalorder %s13, 0
    %p97 = por %p95, %p96
    %p98 = scmp.ne.s32.totalorder %s84, %s85
    %p99 = scmp.eq.s32.totalorder %s14, 1
    %p100 = por %p98, %p99
    %p102 = scmp.ne.s32.totalorder %s85, %s101
    %p103 = scmp.eq.s32.totalorder %s14, 0
    %p104 = por %p102, %p103
    %p105 = scmp.le.s32.totalorder 1, %s8
    %p106 = scmp.lt.s32.totalorder %s8, 3
    %p107 = pnand %p105, %p106
    %p108 = pneg %p107
    // Predicated region
    $region9: #{ssd_l2norm.1} parent=5 // pred_check
      _
    $region10: #{ssd_l2norm.1} parent=5 // pred_check_branch
      %110 = sbr.rel (%p107) target = $region12
    $region11: #{ssd_l2norm.1} parent=5 // pred_region
      %s111 = ssub.s32 %s8, 1
      // Predicated region
      $region13: #{ssd_l2norm.1} parent=11 // pred_check
        %p112 = pneg %p69
      $region14: #{ssd_l2norm.1} parent=11 // pred_check_branch
        %114 = sbr.rel (%p112) target = $region16
      $region15: #{ssd_l2norm.1} parent=11 // pred_region
        _
      $region16: #{ssd_l2norm.1} parent=11 // pred_fallthru
        _
    $region12: #{ssd_l2norm.1} parent=5 // pred_fallthru
      _
    %p115 = scmp.lt.s32.totalorder %s8, 2
    // Predicated region
    $region17: #{ssd_l2norm.1} parent=5 // pred_check
      %p116 = pneg %p115
    $region18: #{ssd_l2norm.1} parent=5 // pred_check_branch
      %118 = sbr.rel (%p116) target = $region20
    $region19: #{ssd_l2norm.1} parent=5 // pred_region
      // Predicated region
      $region21: #{ssd_l2norm.1} parent=19 // pred_check
        %p119 = pneg %p42
      $region22: #{ssd_l2norm.1} parent=19 // pred_check_branch
        %121 = sbr.rel (%p119) target = $region24
      $region23: #{ssd_l2norm.1} parent=19 // pred_region
        %s122 = smul.u32 2, %s16
        %p123 = scmp.lt.s32.totalorder %s15, 1
        %s124 = scalar_select %p123, %s15, 1
        %p125 = scmp.lt.s32.totalorder %s122, 1
        %s126 = scalar_select %p125, %s122, 1
        %s127 = smul.addr %s124, 128
        %s128 = sadd.s32 %s126, %s127
        %s129 = smul.addr %s128, 8
        %s130 = scalar_lea.vmem %s0, %s129
        %s131 = smul.u32 2, %s16
      $region24: #{ssd_l2norm.1} parent=19 // pred_fallthru
        _
    $region20: #{ssd_l2norm.1} parent=5 // pred_fallthru
      _
    %p132 = scmp.le.s32.totalorder 1, %s8
    %p133 = scmp.lt.s32.totalorder %s8, 3
    %p134 = pnand %p132, %p133
    %p135 = pneg %p134
    // Predicated region
    $region25: #{ssd_l2norm.1} parent=5 // pred_check
      _
    $region26: #{ssd_l2norm.1} parent=5 // pred_check_branch
      %137 = sbr.rel (%p134) target = $region28
    $region27: #{ssd_l2norm.1} parent=5 // pred_region
      %s138 = ssub.s32 %s8, 1
      %s139 = smul.u32 2, %s18
      %p140 = scmp.lt.s32.totalorder %s17, 1
      %s141 = scalar_select %p140, %s17, 1
      %p142 = scmp.lt.s32.totalorder %s139, 1
      %s143 = scalar_select %p142, %s139, 1
      %s144 = smul.addr %s141, 128
      %s145 = sadd.s32 %s143, %s144
      %s146 = smul.addr %s145, 8
      %s147 = scalar_lea.vmem %s0, %s146
      %p148 = pneg %p48
      %p149 = pneg %p45
      %p150 = pneg %p69
      %p151 = pneg %p66
      %p152 = pneg %p97
      %p153 = pneg %p94
      %s154 = smul.u32 2, %s18
      %p155 = scmp.lt.s32.totalorder %s17, 1
      %s156 = scalar_select %p155, %s17, 1
      %p157 = scmp.lt.s32.totalorder %s154, 1
      %s158 = scalar_select %p157, %s154, 1
      %s159 = smul.addr %s156, 128
      %s160 = sadd.s32 %s158, %s159
      %s161 = smul.addr %s160, 8
      %s162 = scalar_lea.vmem %s2, %s161
      %s163 = smul.u32 2, %s18
      %p164 = scmp.lt.s32.totalorder %s17, 1
      %s165 = scalar_select %p164, %s17, 1
      %p166 = scmp.lt.s32.totalorder %s163, 1
      %s167 = scalar_select %p166, %s163, 1
      %s168 = smul.addr %s165, 128
      %s169 = sadd.s32 %s167, %s168
      %s170 = smul.addr %s169, 8
      %s171 = scalar_lea.vmem %s0, %s170
      %s172 = smul.u32 2, %s18
      %s173 = smul.u32 2, %s18
      %p174 = scmp.lt.s32.totalorder %s17, 1
      %s175 = scalar_select %p174, %s17, 1
      %p176 = scmp.lt.s32.totalorder %s173, 1
      %s177 = scalar_select %p176, %s173, 1
      %s178 = smul.addr %s175, 128
      %s179 = sadd.s32 %s177, %s178
      %s180 = smul.addr %s179, 8
      %s181 = scalar_lea.vmem %s2, %s180
      %s182 = smul.u32 2, %s18
      %v183 = vld [vmem:[%s171] sm:$0xff]
      %v184 = vld [vmem:[%s171 + $0x8] sm:$0xff]
      %v185 = vld [vmem:[%s171 + $0x10] sm:$0xff]
      %v186 = vld [vmem:[%s171 + $0x18] sm:$0xff]
      %v187 = vld [vmem:[%s171 + $0x20] sm:$0xff]
      %v188 = vld [vmem:[%s171 + $0x28] sm:$0xff]
      %v189 = vld [vmem:[%s171 + $0x30] sm:$0xff]
      %v190 = vld [vmem:[%s171 + $0x38] sm:$0xff]
      %v191 = vld [vmem:[%s171 + $0x40] sm:$0xff]
      %v192 = vld [vmem:[%s171 + $0x48] sm:$0xff]
      %v193 = vld [vmem:[%s171 + $0x50] sm:$0xff]
      %v194 = vld [vmem:[%s171 + $0x58] sm:$0xff]
      %v195 = vld [vmem:[%s171 + $0x60] sm:$0xff]
      %v196 = vld [vmem:[%s171 + $0x68] sm:$0xff]
      %v197 = vld [vmem:[%s171 + $0x70] sm:$0xff]
      %v198 = vld [vmem:[%s171 + $0x78] sm:$0xff]
      %v199 = vld [vmem:[%s171 + $0x80] sm:$0xff]
      %v200 = vld [vmem:[%s171 + $0x88] sm:$0xff]
      %v201 = vld [vmem:[%s171 + $0x90] sm:$0xff]
      %v202 = vld [vmem:[%s171 + $0x98] sm:$0xff]
      %v203 = vld [vmem:[%s171 + $0xa0] sm:$0xff]
      %v204 = vld [vmem:[%s171 + $0xa8] sm:$0xff]
      %v205 = vld [vmem:[%s171 + $0xb0] sm:$0xff]
      %v206 = vld [vmem:[%s171 + $0xb8] sm:$0xff]
      %v207 = vld [vmem:[%s171 + $0xc0] sm:$0xff]
      %v208 = vld [vmem:[%s171 + $0xc8] sm:$0xff]
      %v209 = vld [vmem:[%s171 + $0xd0] sm:$0xff]
      %v210 = vld [vmem:[%s171 + $0xd8] sm:$0xff]
      %v211 = vld [vmem:[%s171 + $0xe0] sm:$0xff]
      %v212 = vld [vmem:[%s171 + $0xe8] sm:$0xff]
      %v213 = vld [vmem:[%s171 + $0xf0] sm:$0xff]
      %v214 = vld [vmem:[%s171 + $0xf8] sm:$0xff]
      %v215 = vld [vmem:[%s171 + $0x100] sm:$0xff]
      %v216 = vld [vmem:[%s171 + $0x108] sm:$0xff]
      %v217 = vld [vmem:[%s171 + $0x110] sm:$0xff]
      %v218 = vld [vmem:[%s171 + $0x118] sm:$0xff]
      %v219 = vld [vmem:[%s171 + $0x120] sm:$0xff]
      %v220 = vld [vmem:[%s171 + $0x128] sm:$0xff]
      %v221 = vld [vmem:[%s171 + $0x130] sm:$0xff]
      %v222 = vld [vmem:[%s171 + $0x138] sm:$0xff]
      %v223 = vld [vmem:[%s171 + $0x140] sm:$0xff]
      %v224 = vld [vmem:[%s171 + $0x148] sm:$0xff]
      %v225 = vld [vmem:[%s171 + $0x150] sm:$0xff]
      %v226 = vld [vmem:[%s171 + $0x158] sm:$0xff]
      %v227 = vld [vmem:[%s171 + $0x160] sm:$0xff]
      %v228 = vld [vmem:[%s171 + $0x168] sm:$0xff]
      %v229 = vld [vmem:[%s171 + $0x170] sm:$0xff]
      %v230 = vld [vmem:[%s171 + $0x178] sm:$0xff]
      %v231 = vld [vmem:[%s171 + $0x180] sm:$0xff]
      %v232 = vld [vmem:[%s171 + $0x188] sm:$0xff]
      %v233 = vld [vmem:[%s171 + $0x190] sm:$0xff]
      %v234 = vld [vmem:[%s171 + $0x198] sm:$0xff]
      %v235 = vld [vmem:[%s171 + $0x1a0] sm:$0xff]
      %v236 = vld [vmem:[%s171 + $0x1a8] sm:$0xff]
      %v237 = vld [vmem:[%s171 + $0x1b0] sm:$0xff]
      %v238 = vld [vmem:[%s171 + $0x1b8] sm:$0xff]
      %v239 = vld [vmem:[%s171 + $0x1c0] sm:$0xff]
      %v240 = vld [vmem:[%s171 + $0x1c8] sm:$0xff]
      %v241 = vld [vmem:[%s171 + $0x1d0] sm:$0xff]
      %v242 = vld [vmem:[%s171 + $0x1d8] sm:$0xff]
      %v243 = vld [vmem:[%s171 + $0x1e0] sm:$0xff]
      %v244 = vld [vmem:[%s171 + $0x1e8] sm:$0xff]
      %v245 = vld [vmem:[%s171 + $0x1f0] sm:$0xff]
      %v246 = vld [vmem:[%s171 + $0x1f8] sm:$0xff]
      %v247 = vld [vmem:[%s171 + $0x200] sm:$0xff]
      %v248 = vld [vmem:[%s171 + $0x208] sm:$0xff]
      %v249 = vld [vmem:[%s171 + $0x210] sm:$0xff]
      %v250 = vld [vmem:[%s171 + $0x218] sm:$0xff]
      %v251 = vld [vmem:[%s171 + $0x220] sm:$0xff]
      %v252 = vld [vmem:[%s171 + $0x228] sm:$0xff]
      %v253 = vld [vmem:[%s171 + $0x230] sm:$0xff]
      %v254 = vld [vmem:[%s171 + $0x238] sm:$0xff]
      %v255 = vld [vmem:[%s171 + $0x240] sm:$0xff]
      %v256 = vld [vmem:[%s171 + $0x248] sm:$0xff]
      %v257 = vld [vmem:[%s171 + $0x250] sm:$0xff]
      %v258 = vld [vmem:[%s171 + $0x258] sm:$0xff]
      %v259 = vld [vmem:[%s171 + $0x260] sm:$0xff]
      %v260 = vld [vmem:[%s171 + $0x268] sm:$0xff]
      %v261 = vld [vmem:[%s171 + $0x270] sm:$0xff]
      %v262 = vld [vmem:[%s171 + $0x278] sm:$0xff]
      %v263 = vld [vmem:[%s171 + $0x280] sm:$0xff]
      %v264 = vld [vmem:[%s171 + $0x288] sm:$0xff]
      %v265 = vld [vmem:[%s171 + $0x290] sm:$0xff]
      %v266 = vld [vmem:[%s171 + $0x298] sm:$0xff]
      %v267 = vld [vmem:[%s171 + $0x2a0] sm:$0xff]
      %v268 = vld [vmem:[%s171 + $0x2a8] sm:$0xff]
      %v269 = vld [vmem:[%s171 + $0x2b0] sm:$0xff]
      %v270 = vld [vmem:[%s171 + $0x2b8] sm:$0xff]
      %v271 = vld [vmem:[%s171 + $0x2c0] sm:$0xff]
      %v272 = vld [vmem:[%s171 + $0x2c8] sm:$0xff]
      %v273 = vld [vmem:[%s171 + $0x2d0] sm:$0xff]
      %v274 = vld [vmem:[%s171 + $0x2d8] sm:$0xff]
      %v275 = vld [vmem:[%s171 + $0x2e0] sm:$0xff]
      %v276 = vld [vmem:[%s171 + $0x2e8] sm:$0xff]
      %v277 = vld [vmem:[%s171 + $0x2f0] sm:$0xff]
      %v278 = vld [vmem:[%s171 + $0x2f8] sm:$0xff]
      %v279 = vld [vmem:[%s171 + $0x300] sm:$0xff]
      %v280 = vld [vmem:[%s171 + $0x308] sm:$0xff]
      %v281 = vld [vmem:[%s171 + $0x310] sm:$0xff]
      %v282 = vld [vmem:[%s171 + $0x318] sm:$0xff]
      %v283 = vld [vmem:[%s171 + $0x320] sm:$0xff]
      %v284 = vld [vmem:[%s171 + $0x328] sm:$0xff]
      %v285 = vld [vmem:[%s171 + $0x330] sm:$0xff]
      %v286 = vld [vmem:[%s171 + $0x338] sm:$0xff]
      %v287 = vld [vmem:[%s171 + $0x340] sm:$0xff]
      %v288 = vld [vmem:[%s171 + $0x348] sm:$0xff]
      %v289 = vld [vmem:[%s171 + $0x350] sm:$0xff]
      %v290 = vld [vmem:[%s171 + $0x358] sm:$0xff]
      %v291 = vld [vmem:[%s171 + $0x360] sm:$0xff]
      %v292 = vld [vmem:[%s171 + $0x368] sm:$0xff]
      %v293 = vld [vmem:[%s171 + $0x370] sm:$0xff]
      %v294 = vld [vmem:[%s171 + $0x378] sm:$0xff]
      %v295 = vld [vmem:[%s171 + $0x380] sm:$0xff]
      %v296 = vld [vmem:[%s171 + $0x388] sm:$0xff]
      %v297 = vld [vmem:[%s171 + $0x390] sm:$0xff]
      %v298 = vld [vmem:[%s171 + $0x398] sm:$0xff]
      %v299 = vld [vmem:[%s171 + $0x3a0] sm:$0xff]
      %v300 = vld [vmem:[%s171 + $0x3a8] sm:$0xff]
      %v301 = vld [vmem:[%s171 + $0x3b0] sm:$0xff]
      %v302 = vld [vmem:[%s171 + $0x3b8] sm:$0xff]
      %v303 = vld [vmem:[%s171 + $0x3c0] sm:$0xff]
      %v304 = vld [vmem:[%s171 + $0x3c8] sm:$0xff]
      %v305 = vld [vmem:[%s171 + $0x3d0] sm:$0xff]
      %v306 = vld [vmem:[%s171 + $0x3d8] sm:$0xff]
      %v307 = vld [vmem:[%s171 + $0x3e0] sm:$0xff]
      %v308 = vld [vmem:[%s171 + $0x3e8] sm:$0xff]
      %v309 = vld [vmem:[%s171 + $0x3f0] sm:$0xff]
      %v310 = vld [vmem:[%s171 + $0x3f8] sm:$0xff]
      %v311 = vmul.f32 %v183, %v183
      %v312 = vmul.f32 %v184, %v184
      %v313 = vmul.f32 %v185, %v185
      %v314 = vmul.f32 %v186, %v186
      %v315 = vmul.f32 %v187, %v187
      %v316 = vmul.f32 %v188, %v188
      %v317 = vmul.f32 %v189, %v189
      %v318 = vmul.f32 %v190, %v190
      %v319 = vmul.f32 %v191, %v191
      %v320 = vmul.f32 %v192, %v192
      %v321 = vmul.f32 %v193, %v193
      %v322 = vmul.f32 %v194, %v194
      %v323 = vmul.f32 %v195, %v195
      %v324 = vmul.f32 %v196, %v196
      %v325 = vmul.f32 %v197, %v197
      %v326 = vmul.f32 %v198, %v198
      %v327 = vmul.f32 %v199, %v199
      %v328 = vmul.f32 %v200, %v200
      %v329 = vmul.f32 %v201, %v201
      %v330 = vmul.f32 %v202, %v202
      %v331 = vmul.f32 %v203, %v203
      %v332 = vmul.f32 %v204, %v204
      %v333 = vmul.f32 %v205, %v205
      %v334 = vmul.f32 %v206, %v206
      %v335 = vmul.f32 %v207, %v207
      %v336 = vmul.f32 %v208, %v208
      %v337 = vmul.f32 %v209, %v209
      %v338 = vmul.f32 %v210, %v210
      %v339 = vmul.f32 %v211, %v211
      %v340 = vmul.f32 %v212, %v212
      %v341 = vmul.f32 %v213, %v213
      %v342 = vmul.f32 %v214, %v214
      %v343 = vmul.f32 %v215, %v215
      %v344 = vmul.f32 %v216, %v216
      %v345 = vmul.f32 %v217, %v217
      %v346 = vmul.f32 %v218, %v218
      %v347 = vmul.f32 %v219, %v219
      %v348 = vmul.f32 %v220, %v220
      %v349 = vmul.f32 %v221, %v221
      %v350 = vmul.f32 %v222, %v222
      %v351 = vmul.f32 %v223, %v223
      %v352 = vmul.f32 %v224, %v224
      %v353 = vmul.f32 %v225, %v225
      %v354 = vmul.f32 %v226, %v226
      %v355 = vmul.f32 %v227, %v227
      %v356 = vmul.f32 %v228, %v228
      %v357 = vmul.f32 %v229, %v229
      %v358 = vmul.f32 %v230, %v230
      %v359 = vmul.f32 %v231, %v231
      %v360 = vmul.f32 %v232, %v232
      %v361 = vmul.f32 %v233, %v233
      %v362 = vmul.f32 %v234, %v234
      %v363 = vmul.f32 %v235, %v235
      %v364 = vmul.f32 %v236, %v236
      %v365 = vmul.f32 %v237, %v237
      %v366 = vmul.f32 %v238, %v238
      %v367 = vmul.f32 %v239, %v239
      %v368 = vmul.f32 %v240, %v240
      %v369 = vmul.f32 %v241, %v241
      %v370 = vmul.f32 %v242, %v242
      %v371 = vmul.f32 %v243, %v243
      %v372 = vmul.f32 %v244, %v244
      %v373 = vmul.f32 %v245, %v245
      %v374 = vmul.f32 %v246, %v246
      %v375 = vmul.f32 %v247, %v247
      %v376 = vmul.f32 %v248, %v248
      %v377 = vmul.f32 %v249, %v249
      %v378 = vmul.f32 %v250, %v250
      %v379 = vmul.f32 %v251, %v251
      %v380 = vmul.f32 %v252, %v252
      %v381 = vmul.f32 %v253, %v253
      %v382 = vmul.f32 %v254, %v254
      %v383 = vmul.f32 %v255, %v255
      %v384 = vmul.f32 %v256, %v256
      %v385 = vmul.f32 %v257, %v257
      %v386 = vmul.f32 %v258, %v258
      %v387 = vmul.f32 %v259, %v259
      %v388 = vmul.f32 %v260, %v260
      %v389 = vmul.f32 %v261, %v261
      %v390 = vmul.f32 %v262, %v262
      %v391 = vmul.f32 %v263, %v263
      %v392 = vmul.f32 %v264, %v264
      %v393 = vmul.f32 %v265, %v265
      %v394 = vmul.f32 %v266, %v266
      %v395 = vmul.f32 %v267, %v267
      %v396 = vmul.f32 %v268, %v268
      %v397 = vmul.f32 %v269, %v269
      %v398 = vmul.f32 %v270, %v270
      %v399 = vmul.f32 %v271, %v271
      %v400 = vmul.f32 %v272, %v272
      %v401 = vmul.f32 %v273, %v273
      %v402 = vmul.f32 %v274, %v274
      %v403 = vmul.f32 %v275, %v275
      %v404 = vmul.f32 %v276, %v276
      %v405 = vmul.f32 %v277, %v277
      %v406 = vmul.f32 %v278, %v278
      %v407 = vmul.f32 %v279, %v279
      %v408 = vmul.f32 %v280, %v280
      %v409 = vmul.f32 %v281, %v281
      %v410 = vmul.f32 %v282, %v282
      %v411 = vmul.f32 %v283, %v283
      %v412 = vmul.f32 %v284, %v284
      %v413 = vmul.f32 %v285, %v285
      %v414 = vmul.f32 %v286, %v286
      %v415 = vmul.f32 %v287, %v287
      %v416 = vmul.f32 %v288, %v288
      %v417 = vmul.f32 %v289, %v289
      %v418 = vmul.f32 %v290, %v290
      %v419 = vmul.f32 %v291, %v291
      %v420 = vmul.f32 %v292, %v292
      %v421 = vmul.f32 %v293, %v293
      %v422 = vmul.f32 %v294, %v294
      %v423 = vmul.f32 %v295, %v295
      %v424 = vmul.f32 %v296, %v296
      %v425 = vmul.f32 %v297, %v297
      %v426 = vmul.f32 %v298, %v298
      %v427 = vmul.f32 %v299, %v299
      %v428 = vmul.f32 %v300, %v300
      %v429 = vmul.f32 %v301, %v301
      %v430 = vmul.f32 %v302, %v302
      %v431 = vmul.f32 %v303, %v303
      %v432 = vmul.f32 %v304, %v304
      %v433 = vmul.f32 %v305, %v305
      %v434 = vmul.f32 %v306, %v306
      %v435 = vmul.f32 %v307, %v307
      %v436 = vmul.f32 %v308, %v308
      %v437 = vmul.f32 %v309, %v309
      %v438 = vmul.f32 %v310, %v310
      %v439 = vadd.f32 %v311, %v313
      %v440 = vadd.f32 %v439, %v315
      %v441 = vadd.f32 %v440, %v317
      %v442 = vadd.f32 %v441, %v319
      %v443 = vadd.f32 %v442, %v321
      %v444 = vadd.f32 %v443, %v323
      %v445 = vadd.f32 %v444, %v325
      %v446 = vadd.f32 %v445, %v327
      %v447 = vadd.f32 %v446, %v329
      %v448 = vadd.f32 %v447, %v331
      %v449 = vadd.f32 %v448, %v333
      %v450 = vadd.f32 %v449, %v335
      %v451 = vadd.f32 %v450, %v337
      %v452 = vadd.f32 %v451, %v339
      %v453 = vadd.f32 %v452, %v341
      %v454 = vadd.f32 %v453, %v343
      %v455 = vadd.f32 %v454, %v345
      %v456 = vadd.f32 %v455, %v347
      %v457 = vadd.f32 %v456, %v349
      %v458 = vadd.f32 %v457, %v351
      %v459 = vadd.f32 %v458, %v353
      %v460 = vadd.f32 %v459, %v355
      %v461 = vadd.f32 %v460, %v357
      %v462 = vadd.f32 %v461, %v359
      %v463 = vadd.f32 %v462, %v361
      %v464 = vadd.f32 %v463, %v363
      %v465 = vadd.f32 %v464, %v365
      %v466 = vadd.f32 %v465, %v367
      %v467 = vadd.f32 %v466, %v369
      %v468 = vadd.f32 %v467, %v371
      %v469 = vadd.f32 %v468, %v373
      %v470 = vadd.f32 %v469, %v375
      %v471 = vadd.f32 %v470, %v377
      %v472 = vadd.f32 %v471, %v379
      %v473 = vadd.f32 %v472, %v381
      %v474 = vadd.f32 %v473, %v383
      %v475 = vadd.f32 %v474, %v385
      %v476 = vadd.f32 %v475, %v387
      %v477 = vadd.f32 %v476, %v389
      %v478 = vadd.f32 %v477, %v391
      %v479 = vadd.f32 %v478, %v393
      %v480 = vadd.f32 %v479, %v395
      %v481 = vadd.f32 %v480, %v397
      %v482 = vadd.f32 %v481, %v399
      %v483 = vadd.f32 %v482, %v401
      %v484 = vadd.f32 %v483, %v403
      %v485 = vadd.f32 %v484, %v405
      %v486 = vadd.f32 %v485, %v407
      %v487 = vadd.f32 %v486, %v409
      %v488 = vadd.f32 %v487, %v411
      %v489 = vadd.f32 %v488, %v413
      %v490 = vadd.f32 %v489, %v415
      %v491 = vadd.f32 %v490, %v417
      %v492 = vadd.f32 %v491, %v419
      %v493 = vadd.f32 %v492, %v421
      %v494 = vadd.f32 %v493, %v423
      %v495 = vadd.f32 %v494, %v425
      %v496 = vadd.f32 %v495, %v427
      %v497 = vadd.f32 %v496, %v429
      %v498 = vadd.f32 %v497, %v431
      %v499 = vadd.f32 %v498, %v433
      %v500 = vadd.f32 %v499, %v435
      %v501 = vadd.f32 %v500, %v437
      %v502 = vrot.slane %v501, 4
      %v503 = vadd.f32 %v501, %v502
      %v504 = vrot.slane %v503, 2
      %v505 = vadd.f32 %v503, %v504
      %v506 = vrot.slane %v505, 1
      %v507 = vadd.f32 %v505, %v506
      %v508 = vadd.f32 %v312, %v314
      %v509 = vadd.f32 %v508, %v316
      %v510 = vadd.f32 %v509, %v318
      %v511 = vadd.f32 %v510, %v320
      %v512 = vadd.f32 %v511, %v322
      %v513 = vadd.f32 %v512, %v324
      %v514 = vadd.f32 %v513, %v326
      %v515 = vadd.f32 %v514, %v328
      %v516 = vadd.f32 %v515, %v330
      %v517 = vadd.f32 %v516, %v332
      %v518 = vadd.f32 %v517, %v334
      %v519 = vadd.f32 %v518, %v336
      %v520 = vadd.f32 %v519, %v338
      %v521 = vadd.f32 %v520, %v340
      %v522 = vadd.f32 %v521, %v342
      %v523 = vadd.f32 %v522, %v344
      %v524 = vadd.f32 %v523, %v346
      %v525 = vadd.f32 %v524, %v348
      %v526 = vadd.f32 %v525, %v350
      %v527 = vadd.f32 %v526, %v352
      %v528 = vadd.f32 %v527, %v354
      %v529 = vadd.f32 %v528, %v356
      %v530 = vadd.f32 %v529, %v358
      %v531 = vadd.f32 %v530, %v360
      %v532 = vadd.f32 %v531, %v362
      %v533 = vadd.f32 %v532, %v364
      %v534 = vadd.f32 %v533, %v366
      %v535 = vadd.f32 %v534, %v368
      %v536 = vadd.f32 %v535, %v370
      %v537 = vadd.f32 %v536, %v372
      %v538 = vadd.f32 %v537, %v374
      %v539 = vadd.f32 %v538, %v376
      %v540 = vadd.f32 %v539, %v378
      %v541 = vadd.f32 %v540, %v380
      %v542 = vadd.f32 %v541, %v382
      %v543 = vadd.f32 %v542, %v384
      %v544 = vadd.f32 %v543, %v386
      %v545 = vadd.f32 %v544, %v388
      %v546 = vadd.f32 %v545, %v390
      %v547 = vadd.f32 %v546, %v392
      %v548 = vadd.f32 %v547, %v394
      %v549 = vadd.f32 %v548, %v396
      %v550 = vadd.f32 %v549, %v398
      %v551 = vadd.f32 %v550, %v400
      %v552 = vadd.f32 %v551, %v402
      %v553 = vadd.f32 %v552, %v404
      %v554 = vadd.f32 %v553, %v406
      %v555 = vadd.f32 %v554, %v408
      %v556 = vadd.f32 %v555, %v410
      %v557 = vadd.f32 %v556, %v412
      %v558 = vadd.f32 %v557, %v414
      %v559 = vadd.f32 %v558, %v416
      %v560 = vadd.f32 %v559, %v418
      %v561 = vadd.f32 %v560, %v420
      %v562 = vadd.f32 %v561, %v422
      %v563 = vadd.f32 %v562, %v424
      %v564 = vadd.f32 %v563, %v426
      %v565 = vadd.f32 %v564, %v428
      %v566 = vadd.f32 %v565, %v430
      %v567 = vadd.f32 %v566, %v432
      %v568 = vadd.f32 %v567, %v434
      %v569 = vadd.f32 %v568, %v436
      %v570 = vadd.f32 %v569, %v438
      %v571 = vrot.slane %v570, 4
      %v572 = vadd.f32 %v570, %v571
      %v573 = vrot.slane %v572, 2
      %v574 = vadd.f32 %v572, %v573
      %v575 = vrot.slane %v574, 1
      %v576 = vadd.f32 %v574, %v575
      %v577 = vrsqrt.pop %v507
      %v578 = vmul.f32 %v507, %v577
      %vm579 = vcmp.eq.f32.partialorder %v507, inf
      %v580 = vsel %vm579, %v507, %v578
      %vm581 = vcmp.eq.f32.partialorder %v507, 0.0
      %v582 = vand.u32 %v507, 2147483648
      %v583 = vsel %vm581, %v582, %v580
      %v584 = vrsqrt.pop %v576
      %v585 = vmul.f32 %v576, %v584
      %vm586 = vcmp.eq.f32.partialorder %v576, inf
      %v587 = vsel %vm586, %v576, %v585
      %vm588 = vcmp.eq.f32.partialorder %v576, 0.0
      %v589 = vand.u32 %v576, 2147483648
      %v590 = vsel %vm588, %v589, %v587
      %v591 = vadd.f32 %v583, 1e-10
      %v592 = vadd.f32 %v590, 1e-10
      %v593 = vrcp.pop %v591
      %v594 = vmul.f32 1.0, %v593
      %v595 = vrcp.pop %v592
      %v596 = vmul.f32 1.0, %v595
      %v597 = vld [vmem:[%s1] sm:$0xff]
      %v598 = vld [vmem:[%s1 + $0x8] sm:$0xff]
      %v599 = vld [vmem:[%s1 + $0x10] sm:$0xff]
      %v600 = vld [vmem:[%s1 + $0x18] sm:$0xff]
      %v601 = vld [vmem:[%s1 + $0x20] sm:$0xff]
      %v602 = vld [vmem:[%s1 + $0x28] sm:$0xff]
      %v603 = vld [vmem:[%s1 + $0x30] sm:$0xff]
      %v604 = vld [vmem:[%s1 + $0x38] sm:$0xff]
      %v605 = vld [vmem:[%s1 + $0x40] sm:$0xff]
      %v606 = vld [vmem:[%s1 + $0x48] sm:$0xff]
      %v607 = vld [vmem:[%s1 + $0x50] sm:$0xff]
      %v608 = vld [vmem:[%s1 + $0x58] sm:$0xff]
      %v609 = vld [vmem:[%s1 + $0x60] sm:$0xff]
      %v610 = vld [vmem:[%s1 + $0x68] sm:$0xff]
      %v611 = vld [vmem:[%s1 + $0x70] sm:$0xff]
      %v612 = vld [vmem:[%s1 + $0x78] sm:$0xff]
      %v613 = vld [vmem:[%s1 + $0x80] sm:$0xff]
      %v614 = vld [vmem:[%s1 + $0x88] sm:$0xff]
      %v615 = vld [vmem:[%s1 + $0x90] sm:$0xff]
      %v616 = vld [vmem:[%s1 + $0x98] sm:$0xff]
      %v617 = vld [vmem:[%s1 + $0xa0] sm:$0xff]
      %v618 = vld [vmem:[%s1 + $0xa8] sm:$0xff]
      %v619 = vld [vmem:[%s1 + $0xb0] sm:$0xff]
      %v620 = vld [vmem:[%s1 + $0xb8] sm:$0xff]
      %v621 = vld [vmem:[%s1 + $0xc0] sm:$0xff]
      %v622 = vld [vmem:[%s1 + $0xc8] sm:$0xff]
      %v623 = vld [vmem:[%s1 + $0xd0] sm:$0xff]
      %v624 = vld [vmem:[%s1 + $0xd8] sm:$0xff]
      %v625 = vld [vmem:[%s1 + $0xe0] sm:$0xff]
      %v626 = vld [vmem:[%s1 + $0xe8] sm:$0xff]
      %v627 = vld [vmem:[%s1 + $0xf0] sm:$0xff]
      %v628 = vld [vmem:[%s1 + $0xf8] sm:$0xff]
      %v629 = vld [vmem:[%s1 + $0x100] sm:$0xff]
      %v630 = vld [vmem:[%s1 + $0x108] sm:$0xff]
      %v631 = vld [vmem:[%s1 + $0x110] sm:$0xff]
      %v632 = vld [vmem:[%s1 + $0x118] sm:$0xff]
      %v633 = vld [vmem:[%s1 + $0x120] sm:$0xff]
      %v634 = vld [vmem:[%s1 + $0x128] sm:$0xff]
      %v635 = vld [vmem:[%s1 + $0x130] sm:$0xff]
      %v636 = vld [vmem:[%s1 + $0x138] sm:$0xff]
      %v637 = vld [vmem:[%s1 + $0x140] sm:$0xff]
      %v638 = vld [vmem:[%s1 + $0x148] sm:$0xff]
      %v639 = vld [vmem:[%s1 + $0x150] sm:$0xff]
      %v640 = vld [vmem:[%s1 + $0x158] sm:$0xff]
      %v641 = vld [vmem:[%s1 + $0x160] sm:$0xff]
      %v642 = vld [vmem:[%s1 + $0x168] sm:$0xff]
      %v643 = vld [vmem:[%s1 + $0x170] sm:$0xff]
      %v644 = vld [vmem:[%s1 + $0x178] sm:$0xff]
      %v645 = vld [vmem:[%s1 + $0x180] sm:$0xff]
      %v646 = vld [vmem:[%s1 + $0x188] sm:$0xff]
      %v647 = vld [vmem:[%s1 + $0x190] sm:$0xff]
      %v648 = vld [vmem:[%s1 + $0x198] sm:$0xff]
      %v649 = vld [vmem:[%s1 + $0x1a0] sm:$0xff]
      %v650 = vld [vmem:[%s1 + $0x1a8] sm:$0xff]
      %v651 = vld [vmem:[%s1 + $0x1b0] sm:$0xff]
      %v652 = vld [vmem:[%s1 + $0x1b8] sm:$0xff]
      %v653 = vld [vmem:[%s1 + $0x1c0] sm:$0xff]
      %v654 = vld [vmem:[%s1 + $0x1c8] sm:$0xff]
      %v655 = vld [vmem:[%s1 + $0x1d0] sm:$0xff]
      %v656 = vld [vmem:[%s1 + $0x1d8] sm:$0xff]
      %v657 = vld [vmem:[%s1 + $0x1e0] sm:$0xff]
      %v658 = vld [vmem:[%s1 + $0x1e8] sm:$0xff]
      %v659 = vld [vmem:[%s1 + $0x1f0] sm:$0xff]
      %v660 = vld [vmem:[%s1 + $0x1f8] sm:$0xff]
      %662 = vset.pattern.permute.xlu0 0
      %663 = vperm.xlu0 %662, %v597
      %v664 = vpop.permute.xlu0 %663
      %667 = vset.pattern.permute.xlu0 0
      %668 = vperm.xlu0 %667, %v598
      %v669 = vpop.permute.xlu0 %668
      %672 = vset.pattern.permute.xlu0 0
      %673 = vperm.xlu0 %672, %v599
      %v674 = vpop.permute.xlu0 %673
      %677 = vset.pattern.permute.xlu0 0
      %678 = vperm.xlu0 %677, %v600
      %v679 = vpop.permute.xlu0 %678
      %682 = vset.pattern.permute.xlu0 0
      %683 = vperm.xlu0 %682, %v601
      %v684 = vpop.permute.xlu0 %683
      %687 = vset.pattern.permute.xlu0 0
      %688 = vperm.xlu0 %687, %v602
      %v689 = vpop.permute.xlu0 %688
      %692 = vset.pattern.permute.xlu0 0
      %693 = vperm.xlu0 %692, %v603
      %v694 = vpop.permute.xlu0 %693
      %697 = vset.pattern.permute.xlu0 0
      %698 = vperm.xlu0 %697, %v604
      %v699 = vpop.permute.xlu0 %698
      %702 = vset.pattern.permute.xlu0 0
      %703 = vperm.xlu0 %702, %v605
      %v704 = vpop.permute.xlu0 %703
      %707 = vset.pattern.permute.xlu0 0
      %708 = vperm.xlu0 %707, %v606
      %v709 = vpop.permute.xlu0 %708
      %712 = vset.pattern.permute.xlu0 0
      %713 = vperm.xlu0 %712, %v607
      %v714 = vpop.permute.xlu0 %713
      %717 = vset.pattern.permute.xlu0 0
      %718 = vperm.xlu0 %717, %v608
      %v719 = vpop.permute.xlu0 %718
      %722 = vset.pattern.permute.xlu0 0
      %723 = vperm.xlu0 %722, %v609
      %v724 = vpop.permute.xlu0 %723
      %727 = vset.pattern.permute.xlu0 0
      %728 = vperm.xlu0 %727, %v610
      %v729 = vpop.permute.xlu0 %728
      %732 = vset.pattern.permute.xlu0 0
      %733 = vperm.xlu0 %732, %v611
      %v734 = vpop.permute.xlu0 %733
      %737 = vset.pattern.permute.xlu0 0
      %738 = vperm.xlu0 %737, %v612
      %v739 = vpop.permute.xlu0 %738
      %742 = vset.pattern.permute.xlu0 0
      %743 = vperm.xlu0 %742, %v613
      %v744 = vpop.permute.xlu0 %743
      %747 = vset.pattern.permute.xlu0 0
      %748 = vperm.xlu0 %747, %v614
      %v749 = vpop.permute.xlu0 %748
      %752 = vset.pattern.permute.xlu0 0
      %753 = vperm.xlu0 %752, %v615
      %v754 = vpop.permute.xlu0 %753
      %757 = vset.pattern.permute.xlu0 0
      %758 = vperm.xlu0 %757, %v616
      %v759 = vpop.permute.xlu0 %758
      %762 = vset.pattern.permute.xlu0 0
      %763 = vperm.xlu0 %762, %v617
      %v764 = vpop.permute.xlu0 %763
      %767 = vset.pattern.permute.xlu0 0
      %768 = vperm.xlu0 %767, %v618
      %v769 = vpop.permute.xlu0 %768
      %772 = vset.pattern.permute.xlu0 0
      %773 = vperm.xlu0 %772, %v619
      %v774 = vpop.permute.xlu0 %773
      %777 = vset.pattern.permute.xlu0 0
      %778 = vperm.xlu0 %777, %v620
      %v779 = vpop.permute.xlu0 %778
      %782 = vset.pattern.permute.xlu0 0
      %783 = vperm.xlu0 %782, %v621
      %v784 = vpop.permute.xlu0 %783
      %787 = vset.pattern.permute.xlu0 0
      %788 = vperm.xlu0 %787, %v622
      %v789 = vpop.permute.xlu0 %788
      %792 = vset.pattern.permute.xlu0 0
      %793 = vperm.xlu0 %792, %v623
      %v794 = vpop.permute.xlu0 %793
      %797 = vset.pattern.permute.xlu0 0
      %798 = vperm.xlu0 %797, %v624
      %v799 = vpop.permute.xlu0 %798
      %802 = vset.pattern.permute.xlu0 0
      %803 = vperm.xlu0 %802, %v625
      %v804 = vpop.permute.xlu0 %803
      %807 = vset.pattern.permute.xlu0 0
      %808 = vperm.xlu0 %807, %v626
      %v809 = vpop.permute.xlu0 %808
      %812 = vset.pattern.permute.xlu0 0
      %813 = vperm.xlu0 %812, %v627
      %v814 = vpop.permute.xlu0 %813
      %817 = vset.pattern.permute.xlu0 0
      %818 = vperm.xlu0 %817, %v628
      %v819 = vpop.permute.xlu0 %818
      %822 = vset.pattern.permute.xlu0 0
      %823 = vperm.xlu0 %822, %v629
      %v824 = vpop.permute.xlu0 %823
      %827 = vset.pattern.permute.xlu0 0
      %828 = vperm.xlu0 %827, %v630
      %v829 = vpop.permute.xlu0 %828
      %832 = vset.pattern.permute.xlu0 0
      %833 = vperm.xlu0 %832, %v631
      %v834 = vpop.permute.xlu0 %833
      %837 = vset.pattern.permute.xlu0 0
      %838 = vperm.xlu0 %837, %v632
      %v839 = vpop.permute.xlu0 %838
      %842 = vset.pattern.permute.xlu0 0
      %843 = vperm.xlu0 %842, %v633
      %v844 = vpop.permute.xlu0 %843
      %847 = vset.pattern.permute.xlu0 0
      %848 = vperm.xlu0 %847, %v634
      %v849 = vpop.permute.xlu0 %848
      %852 = vset.pattern.permute.xlu0 0
      %853 = vperm.xlu0 %852, %v635
      %v854 = vpop.permute.xlu0 %853
      %857 = vset.pattern.permute.xlu0 0
      %858 = vperm.xlu0 %857, %v636
      %v859 = vpop.permute.xlu0 %858
      %862 = vset.pattern.permute.xlu0 0
      %863 = vperm.xlu0 %862, %v637
      %v864 = vpop.permute.xlu0 %863
      %867 = vset.pattern.permute.xlu0 0
      %868 = vperm.xlu0 %867, %v638
      %v869 = vpop.permute.xlu0 %868
      %872 = vset.pattern.permute.xlu0 0
      %873 = vperm.xlu0 %872, %v639
      %v874 = vpop.permute.xlu0 %873
      %877 = vset.pattern.permute.xlu0 0
      %878 = vperm.xlu0 %877, %v640
      %v879 = vpop.permute.xlu0 %878
      %882 = vset.pattern.permute.xlu0 0
      %883 = vperm.xlu0 %882, %v641
      %v884 = vpop.permute.xlu0 %883
      %887 = vset.pattern.permute.xlu0 0
      %888 = vperm.xlu0 %887, %v642
      %v889 = vpop.permute.xlu0 %888
      %892 = vset.pattern.permute.xlu0 0
      %893 = vperm.xlu0 %892, %v643
      %v894 = vpop.permute.xlu0 %893
      %897 = vset.pattern.permute.xlu0 0
      %898 = vperm.xlu0 %897, %v644
      %v899 = vpop.permute.xlu0 %898
      %902 = vset.pattern.permute.xlu0 0
      %903 = vperm.xlu0 %902, %v645
      %v904 = vpop.permute.xlu0 %903
      %907 = vset.pattern.permute.xlu0 0
      %908 = vperm.xlu0 %907, %v646
      %v909 = vpop.permute.xlu0 %908
      %912 = vset.pattern.permute.xlu0 0
      %913 = vperm.xlu0 %912, %v647
      %v914 = vpop.permute.xlu0 %913
      %917 = vset.pattern.permute.xlu0 0
      %918 = vperm.xlu0 %917, %v648
      %v919 = vpop.permute.xlu0 %918
      %922 = vset.pattern.permute.xlu0 0
      %923 = vperm.xlu0 %922, %v649
      %v924 = vpop.permute.xlu0 %923
      %927 = vset.pattern.permute.xlu0 0
      %928 = vperm.xlu0 %927, %v650
      %v929 = vpop.permute.xlu0 %928
      %932 = vset.pattern.permute.xlu0 0
      %933 = vperm.xlu0 %932, %v651
      %v934 = vpop.permute.xlu0 %933
      %937 = vset.pattern.permute.xlu0 0
      %938 = vperm.xlu0 %937, %v652
      %v939 = vpop.permute.xlu0 %938
      %942 = vset.pattern.permute.xlu0 0
      %943 = vperm.xlu0 %942, %v653
      %v944 = vpop.permute.xlu0 %943
      %947 = vset.pattern.permute.xlu0 0
      %948 = vperm.xlu0 %947, %v654
      %v949 = vpop.permute.xlu0 %948
      %952 = vset.pattern.permute.xlu0 0
      %953 = vperm.xlu0 %952, %v655
      %v954 = vpop.permute.xlu0 %953
      %957 = vset.pattern.permute.xlu0 0
      %958 = vperm.xlu0 %957, %v656
      %v959 = vpop.permute.xlu0 %958
      %962 = vset.pattern.permute.xlu0 0
      %963 = vperm.xlu0 %962, %v657
      %v964 = vpop.permute.xlu0 %963
      %967 = vset.pattern.permute.xlu0 0
      %968 = vperm.xlu0 %967, %v658
      %v969 = vpop.permute.xlu0 %968
      %972 = vset.pattern.permute.xlu0 0
      %973 = vperm.xlu0 %972, %v659
      %v974 = vpop.permute.xlu0 %973
      %977 = vset.pattern.permute.xlu0 0
      %978 = vperm.xlu0 %977, %v660
      %v979 = vpop.permute.xlu0 %978
      %v981 = vmul.f32 %v664, %v594
      %v982 = vmul.f32 %v664, %v596
      %v983 = vmul.f32 %v669, %v594
      %v984 = vmul.f32 %v669, %v596
      %v985 = vmul.f32 %v674, %v594
      %v986 = vmul.f32 %v674, %v596
      %v987 = vmul.f32 %v679, %v594
      %v988 = vmul.f32 %v679, %v596
      %v989 = vmul.f32 %v684, %v594
      %v990 = vmul.f32 %v684, %v596
      %v991 = vmul.f32 %v689, %v594
      %v992 = vmul.f32 %v689, %v596
      %v993 = vmul.f32 %v694, %v594
      %v994 = vmul.f32 %v694, %v596
      %v995 = vmul.f32 %v699, %v594
      %v996 = vmul.f32 %v699, %v596
      %v997 = vmul.f32 %v704, %v594
      %v998 = vmul.f32 %v704, %v596
      %v999 = vmul.f32 %v709, %v594
      %v1000 = vmul.f32 %v709, %v596
      %v1001 = vmul.f32 %v714, %v594
      %v1002 = vmul.f32 %v714, %v596
      %v1003 = vmul.f32 %v719, %v594
      %v1004 = vmul.f32 %v719, %v596
      %v1005 = vmul.f32 %v724, %v594
      %v1006 = vmul.f32 %v724, %v596
      %v1007 = vmul.f32 %v729, %v594
      %v1008 = vmul.f32 %v729, %v596
      %v1009 = vmul.f32 %v734, %v594
      %v1010 = vmul.f32 %v734, %v596
      %v1011 = vmul.f32 %v739, %v594
      %v1012 = vmul.f32 %v739, %v596
      %v1013 = vmul.f32 %v744, %v594
      %v1014 = vmul.f32 %v744, %v596
      %v1015 = vmul.f32 %v749, %v594
      %v1016 = vmul.f32 %v749, %v596
      %v1017 = vmul.f32 %v754, %v594
      %v1018 = vmul.f32 %v754, %v596
      %v1019 = vmul.f32 %v759, %v594
      %v1020 = vmul.f32 %v759, %v596
      %v1021 = vmul.f32 %v764, %v594
      %v1022 = vmul.f32 %v764, %v596
      %v1023 = vmul.f32 %v769, %v594
      %v1024 = vmul.f32 %v769, %v596
      %v1025 = vmul.f32 %v774, %v594
      %v1026 = vmul.f32 %v774, %v596
      %v1027 = vmul.f32 %v779, %v594
      %v1028 = vmul.f32 %v779, %v596
      %v1029 = vmul.f32 %v784, %v594
      %v1030 = vmul.f32 %v784, %v596
      %v1031 = vmul.f32 %v789, %v594
      %v1032 = vmul.f32 %v789, %v596
      %v1033 = vmul.f32 %v794, %v594
      %v1034 = vmul.f32 %v794, %v596
      %v1035 = vmul.f32 %v799, %v594
      %v1036 = vmul.f32 %v799, %v596
      %v1037 = vmul.f32 %v804, %v594
      %v1038 = vmul.f32 %v804, %v596
      %v1039 = vmul.f32 %v809, %v594
      %v1040 = vmul.f32 %v809, %v596
      %v1041 = vmul.f32 %v814, %v594
      %v1042 = vmul.f32 %v814, %v596
      %v1043 = vmul.f32 %v819, %v594
      %v1044 = vmul.f32 %v819, %v596
      %v1045 = vmul.f32 %v824, %v594
      %v1046 = vmul.f32 %v824, %v596
      %v1047 = vmul.f32 %v829, %v594
      %v1048 = vmul.f32 %v829, %v596
      %v1049 = vmul.f32 %v834, %v594
      %v1050 = vmul.f32 %v834, %v596
      %v1051 = vmul.f32 %v839, %v594
      %v1052 = vmul.f32 %v839, %v596
      %v1053 = vmul.f32 %v844, %v594
      %v1054 = vmul.f32 %v844, %v596
      %v1055 = vmul.f32 %v849, %v594
      %v1056 = vmul.f32 %v849, %v596
      %v1057 = vmul.f32 %v854, %v594
      %v1058 = vmul.f32 %v854, %v596
      %v1059 = vmul.f32 %v859, %v594
      %v1060 = vmul.f32 %v859, %v596
      %v1061 = vmul.f32 %v864, %v594
      %v1062 = vmul.f32 %v864, %v596
      %v1063 = vmul.f32 %v869, %v594
      %v1064 = vmul.f32 %v869, %v596
      %v1065 = vmul.f32 %v874, %v594
      %v1066 = vmul.f32 %v874, %v596
      %v1067 = vmul.f32 %v879, %v594
      %v1068 = vmul.f32 %v879, %v596
      %v1069 = vmul.f32 %v884, %v594
      %v1070 = vmul.f32 %v884, %v596
      %v1071 = vmul.f32 %v889, %v594
      %v1072 = vmul.f32 %v889, %v596
      %v1073 = vmul.f32 %v894, %v594
      %v1074 = vmul.f32 %v894, %v596
      %v1075 = vmul.f32 %v899, %v594
      %v1076 = vmul.f32 %v899, %v596
      %v1077 = vmul.f32 %v904, %v594
      %v1078 = vmul.f32 %v904, %v596
      %v1079 = vmul.f32 %v909, %v594
      %v1080 = vmul.f32 %v909, %v596
      %v1081 = vmul.f32 %v914, %v594
      %v1082 = vmul.f32 %v914, %v596
      %v1083 = vmul.f32 %v919, %v594
      %v1084 = vmul.f32 %v919, %v596
      %v1085 = vmul.f32 %v924, %v594
      %v1086 = vmul.f32 %v924, %v596
      %v1087 = vmul.f32 %v929, %v594
      %v1088 = vmul.f32 %v929, %v596
      %v1089 = vmul.f32 %v934, %v594
      %v1090 = vmul.f32 %v934, %v596
      %v1091 = vmul.f32 %v939, %v594
      %v1092 = vmul.f32 %v939, %v596
      %v1093 = vmul.f32 %v944, %v594
      %v1094 = vmul.f32 %v944, %v596
      %v1095 = vmul.f32 %v949, %v594
      %v1096 = vmul.f32 %v949, %v596
      %v1097 = vmul.f32 %v954, %v594
      %v1098 = vmul.f32 %v954, %v596
      %v1099 = vmul.f32 %v959, %v594
      %v1100 = vmul.f32 %v959, %v596
      %v1101 = vmul.f32 %v964, %v594
      %v1102 = vmul.f32 %v964, %v596
      %v1103 = vmul.f32 %v969, %v594
      %v1104 = vmul.f32 %v969, %v596
      %v1105 = vmul.f32 %v974, %v594
      %v1106 = vmul.f32 %v974, %v596
      %v1107 = vmul.f32 %v979, %v594
      %v1108 = vmul.f32 %v979, %v596
      %v1109 = vmul.f32 %v183, %v981
      %v1110 = vmul.f32 %v184, %v982
      %v1111 = vmul.f32 %v185, %v983
      %v1112 = vmul.f32 %v186, %v984
      %v1113 = vmul.f32 %v187, %v985
      %v1114 = vmul.f32 %v188, %v986
      %v1115 = vmul.f32 %v189, %v987
      %v1116 = vmul.f32 %v190, %v988
      %v1117 = vmul.f32 %v191, %v989
      %v1118 = vmul.f32 %v192, %v990
      %v1119 = vmul.f32 %v193, %v991
      %v1120 = vmul.f32 %v194, %v992
      %v1121 = vmul.f32 %v195, %v993
      %v1122 = vmul.f32 %v196, %v994
      %v1123 = vmul.f32 %v197, %v995
      %v1124 = vmul.f32 %v198, %v996
      %v1125 = vmul.f32 %v199, %v997
      %v1126 = vmul.f32 %v200, %v998
      %v1127 = vmul.f32 %v201, %v999
      %v1128 = vmul.f32 %v202, %v1000
      %v1129 = vmul.f32 %v203, %v1001
      %v1130 = vmul.f32 %v204, %v1002
      %v1131 = vmul.f32 %v205, %v1003
      %v1132 = vmul.f32 %v206, %v1004
      %v1133 = vmul.f32 %v207, %v1005
      %v1134 = vmul.f32 %v208, %v1006
      %v1135 = vmul.f32 %v209, %v1007
      %v1136 = vmul.f32 %v210, %v1008
      %v1137 = vmul.f32 %v211, %v1009
      %v1138 = vmul.f32 %v212, %v1010
      %v1139 = vmul.f32 %v213, %v1011
      %v1140 = vmul.f32 %v214, %v1012
      %v1141 = vmul.f32 %v215, %v1013
      %v1142 = vmul.f32 %v216, %v1014
      %v1143 = vmul.f32 %v217, %v1015
      %v1144 = vmul.f32 %v218, %v1016
      %v1145 = vmul.f32 %v219, %v1017
      %v1146 = vmul.f32 %v220, %v1018
      %v1147 = vmul.f32 %v221, %v1019
      %v1148 = vmul.f32 %v222, %v1020
      %v1149 = vmul.f32 %v223, %v1021
      %v1150 = vmul.f32 %v224, %v1022
      %v1151 = vmul.f32 %v225, %v1023
      %v1152 = vmul.f32 %v226, %v1024
      %v1153 = vmul.f32 %v227, %v1025
      %v1154 = vmul.f32 %v228, %v1026
      %v1155 = vmul.f32 %v229, %v1027
      %v1156 = vmul.f32 %v230, %v1028
      %v1157 = vmul.f32 %v231, %v1029
      %v1158 = vmul.f32 %v232, %v1030
      %v1159 = vmul.f32 %v233, %v1031
      %v1160 = vmul.f32 %v234, %v1032
      %v1161 = vmul.f32 %v235, %v1033
      %v1162 = vmul.f32 %v236, %v1034
      %v1163 = vmul.f32 %v237, %v1035
      %v1164 = vmul.f32 %v238, %v1036
      %v1165 = vmul.f32 %v239, %v1037
      %v1166 = vmul.f32 %v240, %v1038
      %v1167 = vmul.f32 %v241, %v1039
      %v1168 = vmul.f32 %v242, %v1040
      %v1169 = vmul.f32 %v243, %v1041
      %v1170 = vmul.f32 %v244, %v1042
      %v1171 = vmul.f32 %v245, %v1043
      %v1172 = vmul.f32 %v246, %v1044
      %v1173 = vmul.f32 %v247, %v1045
      %v1174 = vmul.f32 %v248, %v1046
      %v1175 = vmul.f32 %v249, %v1047
      %v1176 = vmul.f32 %v250, %v1048
      %v1177 = vmul.f32 %v251, %v1049
      %v1178 = vmul.f32 %v252, %v1050
      %v1179 = vmul.f32 %v253, %v1051
      %v1180 = vmul.f32 %v254, %v1052
      %v1181 = vmul.f32 %v255, %v1053
      %v1182 = vmul.f32 %v256, %v1054
      %v1183 = vmul.f32 %v257, %v1055
      %v1184 = vmul.f32 %v258, %v1056
      %v1185 = vmul.f32 %v259, %v1057
      %v1186 = vmul.f32 %v260, %v1058
      %v1187 = vmul.f32 %v261, %v1059
      %v1188 = vmul.f32 %v262, %v1060
      %v1189 = vmul.f32 %v263, %v1061
      %v1190 = vmul.f32 %v264, %v1062
      %v1191 = vmul.f32 %v265, %v1063
      %v1192 = vmul.f32 %v266, %v1064
      %v1193 = vmul.f32 %v267, %v1065
      %v1194 = vmul.f32 %v268, %v1066
      %v1195 = vmul.f32 %v269, %v1067
      %v1196 = vmul.f32 %v270, %v1068
      %v1197 = vmul.f32 %v271, %v1069
      %v1198 = vmul.f32 %v272, %v1070
      %v1199 = vmul.f32 %v273, %v1071
      %v1200 = vmul.f32 %v274, %v1072
      %v1201 = vmul.f32 %v275, %v1073
      %v1202 = vmul.f32 %v276, %v1074
      %v1203 = vmul.f32 %v277, %v1075
      %v1204 = vmul.f32 %v278, %v1076
      %v1205 = vmul.f32 %v279, %v1077
      %v1206 = vmul.f32 %v280, %v1078
      %v1207 = vmul.f32 %v281, %v1079
      %v1208 = vmul.f32 %v282, %v1080
      %v1209 = vmul.f32 %v283, %v1081
      %v1210 = vmul.f32 %v284, %v1082
      %v1211 = vmul.f32 %v285, %v1083
      %v1212 = vmul.f32 %v286, %v1084
      %v1213 = vmul.f32 %v287, %v1085
      %v1214 = vmul.f32 %v288, %v1086
      %v1215 = vmul.f32 %v289, %v1087
      %v1216 = vmul.f32 %v290, %v1088
      %v1217 = vmul.f32 %v291, %v1089
      %v1218 = vmul.f32 %v292, %v1090
      %v1219 = vmul.f32 %v293, %v1091
      %v1220 = vmul.f32 %v294, %v1092
      %v1221 = vmul.f32 %v295, %v1093
      %v1222 = vmul.f32 %v296, %v1094
      %v1223 = vmul.f32 %v297, %v1095
      %v1224 = vmul.f32 %v298, %v1096
      %v1225 = vmul.f32 %v299, %v1097
      %v1226 = vmul.f32 %v300, %v1098
      %v1227 = vmul.f32 %v301, %v1099
      %v1228 = vmul.f32 %v302, %v1100
      %v1229 = vmul.f32 %v303, %v1101
      %v1230 = vmul.f32 %v304, %v1102
      %v1231 = vmul.f32 %v305, %v1103
      %v1232 = vmul.f32 %v306, %v1104
      %v1233 = vmul.f32 %v307, %v1105
      %v1234 = vmul.f32 %v308, %v1106
      %v1235 = vmul.f32 %v309, %v1107
      %v1236 = vmul.f32 %v310, %v1108
      %1237 = vst [vmem:[%s181] sm:$0xff] %v1109
      %1238 = vst [vmem:[%s181 + $0x8] sm:$0xff] %v1110
      %1239 = vst [vmem:[%s181 + $0x10] sm:$0xff] %v1111
      %1240 = vst [vmem:[%s181 + $0x18] sm:$0xff] %v1112
      %1241 = vst [vmem:[%s181 + $0x20] sm:$0xff] %v1113
      %1242 = vst [vmem:[%s181 + $0x28] sm:$0xff] %v1114
      %1243 = vst [vmem:[%s181 + $0x30] sm:$0xff] %v1115
      %1244 = vst [vmem:[%s181 + $0x38] sm:$0xff] %v1116
      %1245 = vst [vmem:[%s181 + $0x40] sm:$0xff] %v1117
      %1246 = vst [vmem:[%s181 + $0x48] sm:$0xff] %v1118
      %1247 = vst [vmem:[%s181 + $0x50] sm:$0xff] %v1119
      %1248 = vst [vmem:[%s181 + $0x58] sm:$0xff] %v1120
      %1249 = vst [vmem:[%s181 + $0x60] sm:$0xff] %v1121
      %1250 = vst [vmem:[%s181 + $0x68] sm:$0xff] %v1122
      %1251 = vst [vmem:[%s181 + $0x70] sm:$0xff] %v1123
      %1252 = vst [vmem:[%s181 + $0x78] sm:$0xff] %v1124
      %1253 = vst [vmem:[%s181 + $0x80] sm:$0xff] %v1125
      %1254 = vst [vmem:[%s181 + $0x88] sm:$0xff] %v1126
      %1255 = vst [vmem:[%s181 + $0x90] sm:$0xff] %v1127
      %1256 = vst [vmem:[%s181 + $0x98] sm:$0xff] %v1128
      %1257 = vst [vmem:[%s181 + $0xa0] sm:$0xff] %v1129
      %1258 = vst [vmem:[%s181 + $0xa8] sm:$0xff] %v1130
      %1259 = vst [vmem:[%s181 + $0xb0] sm:$0xff] %v1131
      %1260 = vst [vmem:[%s181 + $0xb8] sm:$0xff] %v1132
      %1261 = vst [vmem:[%s181 + $0xc0] sm:$0xff] %v1133
      %1262 = vst [vmem:[%s181 + $0xc8] sm:$0xff] %v1134
      %1263 = vst [vmem:[%s181 + $0xd0] sm:$0xff] %v1135
      %1264 = vst [vmem:[%s181 + $0xd8] sm:$0xff] %v1136
      %1265 = vst [vmem:[%s181 + $0xe0] sm:$0xff] %v1137
      %1266 = vst [vmem:[%s181 + $0xe8] sm:$0xff] %v1138
      %1267 = vst [vmem:[%s181 + $0xf0] sm:$0xff] %v1139
      %1268 = vst [vmem:[%s181 + $0xf8] sm:$0xff] %v1140
      %1269 = vst [vmem:[%s181 + $0x100] sm:$0xff] %v1141
      %1270 = vst [vmem:[%s181 + $0x108] sm:$0xff] %v1142
      %1271 = vst [vmem:[%s181 + $0x110] sm:$0xff] %v1143
      %1272 = vst [vmem:[%s181 + $0x118] sm:$0xff] %v1144
      %1273 = vst [vmem:[%s181 + $0x120] sm:$0xff] %v1145
      %1274 = vst [vmem:[%s181 + $0x128] sm:$0xff] %v1146
      %1275 = vst [vmem:[%s181 + $0x130] sm:$0xff] %v1147
      %1276 = vst [vmem:[%s181 + $0x138] sm:$0xff] %v1148
      %1277 = vst [vmem:[%s181 + $0x140] sm:$0xff] %v1149
      %1278 = vst [vmem:[%s181 + $0x148] sm:$0xff] %v1150
      %1279 = vst [vmem:[%s181 + $0x150] sm:$0xff] %v1151
      %1280 = vst [vmem:[%s181 + $0x158] sm:$0xff] %v1152
      %1281 = vst [vmem:[%s181 + $0x160] sm:$0xff] %v1153
      %1282 = vst [vmem:[%s181 + $0x168] sm:$0xff] %v1154
      %1283 = vst [vmem:[%s181 + $0x170] sm:$0xff] %v1155
      %1284 = vst [vmem:[%s181 + $0x178] sm:$0xff] %v1156
      %1285 = vst [vmem:[%s181 + $0x180] sm:$0xff] %v1157
      %1286 = vst [vmem:[%s181 + $0x188] sm:$0xff] %v1158
      %1287 = vst [vmem:[%s181 + $0x190] sm:$0xff] %v1159
      %1288 = vst [vmem:[%s181 + $0x198] sm:$0xff] %v1160
      %1289 = vst [vmem:[%s181 + $0x1a0] sm:$0xff] %v1161
      %1290 = vst [vmem:[%s181 + $0x1a8] sm:$0xff] %v1162
      %1291 = vst [vmem:[%s181 + $0x1b0] sm:$0xff] %v1163
      %1292 = vst [vmem:[%s181 + $0x1b8] sm:$0xff] %v1164
      %1293 = vst [vmem:[%s181 + $0x1c0] sm:$0xff] %v1165
      %1294 = vst [vmem:[%s181 + $0x1c8] sm:$0xff] %v1166
      %1295 = vst [vmem:[%s181 + $0x1d0] sm:$0xff] %v1167
      %1296 = vst [vmem:[%s181 + $0x1d8] sm:$0xff] %v1168
      %1297 = vst [vmem:[%s181 + $0x1e0] sm:$0xff] %v1169
      %1298 = vst [vmem:[%s181 + $0x1e8] sm:$0xff] %v1170
      %1299 = vst [vmem:[%s181 + $0x1f0] sm:$0xff] %v1171
      %1300 = vst [vmem:[%s181 + $0x1f8] sm:$0xff] %v1172
      %1301 = vst [vmem:[%s181 + $0x200] sm:$0xff] %v1173
      %1302 = vst [vmem:[%s181 + $0x208] sm:$0xff] %v1174
      %1303 = vst [vmem:[%s181 + $0x210] sm:$0xff] %v1175
      %1304 = vst [vmem:[%s181 + $0x218] sm:$0xff] %v1176
      %1305 = vst [vmem:[%s181 + $0x220] sm:$0xff] %v1177
      %1306 = vst [vmem:[%s181 + $0x228] sm:$0xff] %v1178
      %1307 = vst [vmem:[%s181 + $0x230] sm:$0xff] %v1179
      %1308 = vst [vmem:[%s181 + $0x238] sm:$0xff] %v1180
      %1309 = vst [vmem:[%s181 + $0x240] sm:$0xff] %v1181
      %1310 = vst [vmem:[%s181 + $0x248] sm:$0xff] %v1182
      %1311 = vst [vmem:[%s181 + $0x250] sm:$0xff] %v1183
      %1312 = vst [vmem:[%s181 + $0x258] sm:$0xff] %v1184
      %1313 = vst [vmem:[%s181 + $0x260] sm:$0xff] %v1185
      %1314 = vst [vmem:[%s181 + $0x268] sm:$0xff] %v1186
      %1315 = vst [vmem:[%s181 + $0x270] sm:$0xff] %v1187
      %1316 = vst [vmem:[%s181 + $0x278] sm:$0xff] %v1188
      %1317 = vst [vmem:[%s181 + $0x280] sm:$0xff] %v1189
      %1318 = vst [vmem:[%s181 + $0x288] sm:$0xff] %v1190
      %1319 = vst [vmem:[%s181 + $0x290] sm:$0xff] %v1191
      %1320 = vst [vmem:[%s181 + $0x298] sm:$0xff] %v1192
      %1321 = vst [vmem:[%s181 + $0x2a0] sm:$0xff] %v1193
      %1322 = vst [vmem:[%s181 + $0x2a8] sm:$0xff] %v1194
      %1323 = vst [vmem:[%s181 + $0x2b0] sm:$0xff] %v1195
      %1324 = vst [vmem:[%s181 + $0x2b8] sm:$0xff] %v1196
      %1325 = vst [vmem:[%s181 + $0x2c0] sm:$0xff] %v1197
      %1326 = vst [vmem:[%s181 + $0x2c8] sm:$0xff] %v1198
      %1327 = vst [vmem:[%s181 + $0x2d0] sm:$0xff] %v1199
      %1328 = vst [vmem:[%s181 + $0x2d8] sm:$0xff] %v1200
      %1329 = vst [vmem:[%s181 + $0x2e0] sm:$0xff] %v1201
      %1330 = vst [vmem:[%s181 + $0x2e8] sm:$0xff] %v1202
      %1331 = vst [vmem:[%s181 + $0x2f0] sm:$0xff] %v1203
      %1332 = vst [vmem:[%s181 + $0x2f8] sm:$0xff] %v1204
      %1333 = vst [vmem:[%s181 + $0x300] sm:$0xff] %v1205
      %1334 = vst [vmem:[%s181 + $0x308] sm:$0xff] %v1206
      %1335 = vst [vmem:[%s181 + $0x310] sm:$0xff] %v1207
      %1336 = vst [vmem:[%s181 + $0x318] sm:$0xff] %v1208
      %1337 = vst [vmem:[%s181 + $0x320] sm:$0xff] %v1209
      %1338 = vst [vmem:[%s181 + $0x328] sm:$0xff] %v1210
      %1339 = vst [vmem:[%s181 + $0x330] sm:$0xff] %v1211
      %1340 = vst [vmem:[%s181 + $0x338] sm:$0xff] %v1212
      %1341 = vst [vmem:[%s181 + $0x340] sm:$0xff] %v1213
      %1342 = vst [vmem:[%s181 + $0x348] sm:$0xff] %v1214
      %1343 = vst [vmem:[%s181 + $0x350] sm:$0xff] %v1215
      %1344 = vst [vmem:[%s181 + $0x358] sm:$0xff] %v1216
      %1345 = vst [vmem:[%s181 + $0x360] sm:$0xff] %v1217
      %1346 = vst [vmem:[%s181 + $0x368] sm:$0xff] %v1218
      %1347 = vst [vmem:[%s181 + $0x370] sm:$0xff] %v1219
      %1348 = vst [vmem:[%s181 + $0x378] sm:$0xff] %v1220
      %1349 = vst [vmem:[%s181 + $0x380] sm:$0xff] %v1221
      %1350 = vst [vmem:[%s181 + $0x388] sm:$0xff] %v1222
      %1351 = vst [vmem:[%s181 + $0x390] sm:$0xff] %v1223
      %1352 = vst [vmem:[%s181 + $0x398] sm:$0xff] %v1224
      %1353 = vst [vmem:[%s181 + $0x3a0] sm:$0xff] %v1225
      %1354 = vst [vmem:[%s181 + $0x3a8] sm:$0xff] %v1226
      %1355 = vst [vmem:[%s181 + $0x3b0] sm:$0xff] %v1227
      %1356 = vst [vmem:[%s181 + $0x3b8] sm:$0xff] %v1228
      %1357 = vst [vmem:[%s181 + $0x3c0] sm:$0xff] %v1229
      %1358 = vst [vmem:[%s181 + $0x3c8] sm:$0xff] %v1230
      %1359 = vst [vmem:[%s181 + $0x3d0] sm:$0xff] %v1231
      %1360 = vst [vmem:[%s181 + $0x3d8] sm:$0xff] %v1232
      %1361 = vst [vmem:[%s181 + $0x3e0] sm:$0xff] %v1233
      %1362 = vst [vmem:[%s181 + $0x3e8] sm:$0xff] %v1234
      %1363 = vst [vmem:[%s181 + $0x3f0] sm:$0xff] %v1235
      %1364 = vst [vmem:[%s181 + $0x3f8] sm:$0xff] %v1236
      %s1365 = smul.u32 2, %s18
      %p1366 = scmp.lt.s32.totalorder %s17, 1
      %s1367 = scalar_select %p1366, %s17, 1
      %p1368 = scmp.lt.s32.totalorder %s1365, 1
      %s1369 = scalar_select %p1368, %s1365, 1
      %s1370 = smul.addr %s1367, 128
      %s1371 = sadd.s32 %s1369, %s1370
      %s1372 = smul.addr %s1371, 8
      %s1373 = scalar_lea.vmem %s2, %s1372
      // Predicated region
      $region29: #{ssd_l2norm.1} parent=27 // pred_check
        %p1374 = pneg %p94
      $region30: #{ssd_l2norm.1} parent=27 // pred_check_branch
        %1376 = sbr.rel (%p1374) target = $region32
      $region31: #{ssd_l2norm.1} parent=27 // pred_region
        %s1377 = smul.u32 2, %s18
      $region32: #{ssd_l2norm.1} parent=27 // pred_fallthru
        _
    $region28: #{ssd_l2norm.1} parent=5 // pred_fallthru
      _
    %p1378 = scmp.le.s32.totalorder 2, %s8
    // Predicated region
    $region33: #{ssd_l2norm.1} parent=5 // pred_check
      %p1379 = pneg %p1378
    $region34: #{ssd_l2norm.1} parent=5 // pred_check_branch
      %1381 = sbr.rel (%p1379) target = $region36
    $region35: #{ssd_l2norm.1} parent=5 // pred_region
      %s1382 = ssub.s32 %s8, 2
      // Predicated region
      $region37: #{ssd_l2norm.1} parent=35 // pred_check
        %p1383 = pneg %p100
      $region38: #{ssd_l2norm.1} parent=35 // pred_check_branch
        %1385 = sbr.rel (%p1383) target = $region40
      $region39: #{ssd_l2norm.1} parent=35 // pred_region
        %s1386 = smul.u32 2, %s20
        %p1387 = scmp.lt.s32.totalorder %s19, 1
        %s1388 = scalar_select %p1387, %s19, 1
        %p1389 = scmp.lt.s32.totalorder %s1386, 1
        %s1390 = scalar_select %p1389, %s1386, 1
        %s1391 = smul.addr %s1388, 128
        %s1392 = sadd.s32 %s1390, %s1391
        %s1393 = smul.addr %s1392, 8
        %s1394 = scalar_lea.vmem %s2, %s1393
      $region40: #{ssd_l2norm.1} parent=35 // pred_fallthru
        _
    $region36: #{ssd_l2norm.1} parent=5 // pred_fallthru
      _
  $region6: #{ssd_l2norm.1} parent=0 // loop_footer
    %s12 = sadd.s32 1, %s8
  $region7: #{ssd_l2norm.1} parent=0 // loop_footer_branch
    %7 = sbr.rel target = $region3
  $region8: #{ssd_l2norm.1} parent=0 // loop_exit
    _

</llo_original>
